<compile_context>
chip_gen: v5e
topology: v5e:2x2
jax: 0.10.0
libtpu: 0.0.40
codegen_flags: <defaults>
</compile_context>

<pallas_src>
import functools

import jax
import jax.numpy as jnp
from jax.experimental import pallas as pl
from jax.experimental.pallas import tpu as pltpu


def torus_sdf_kernel(center_ref, radii_ref, pts_ref, out_ref):
    # center_ref: SMEM (3,)     radii_ref: SMEM (2,)
    # pts_ref:    VMEM (3, tm, lane_c)   out_ref: VMEM (tm, lane_c)
    cx = center_ref[0]
    cy = center_ref[1]
    cz = center_ref[2]
    r0 = radii_ref[0]
    r1 = radii_ref[1]

    dx = pts_ref[0] - cx                      # (tm, lane_c) plane reads
    dy = pts_ref[1] - cy
    dz = pts_ref[2] - cz

    qx = jnp.sqrt(dx * dx + dy * dy) - r0     # norm over (x, y) minus major radius
    out_ref[...] = jnp.sqrt(qx * qx + dz * dz) - r1   # norm over (qx, z) minus minor


def _pick_tm(rows, tm_target):
    """Tile rows: multiple of 8, <= target, and grid >= 2 whenever possible."""
    tm_target = max(8, (tm_target // 8) * 8)
    if rows >= 16:
        # Keep at least 2 grid steps so both v7x TensorCores get work.
        return min(tm_target, max(8, (rows // 2) // 8 * 8))
    return rows


def _torus_sdf_slab(pts_soa, center, radii, *, tm, buffers):
    """Run the kernel on an SoA slab (3, rows, lane_c) -> (rows, lane_c)."""
    _, rows, lane_c = pts_soa.shape
    grid = pl.cdiv(rows, tm)   # tail tile (if any) is a Pallas boundary block

    pts_kwargs = {}
    if buffers != 2:
        pts_kwargs["pipeline_mode"] = pl.Buffered(buffers)
    pts_spec = pl.BlockSpec((3, tm, lane_c), lambda i: (0, i, 0), **pts_kwargs)

    block_in = 3 * tm * lane_c * 4
    block_out = tm * lane_c * 4
    vmem_limit = min(max(32 << 20, buffers * block_in + 2 * block_out + (8 << 20)),
                     56 << 20)   # stay under v7x's 64 MiB physical VMEM

    return pl.pallas_call(
        torus_sdf_kernel,
        out_shape=jax.ShapeDtypeStruct((rows, lane_c), jnp.float32),
        grid_spec=pl.GridSpec(
            grid=(grid,),
            in_specs=[
                pl.BlockSpec(memory_space=pltpu.SMEM),    # center (3,)
                pl.BlockSpec(memory_space=pltpu.SMEM),    # radii  (2,)
                pts_spec,                                 # point slab
            ],
            out_specs=pl.BlockSpec((tm, lane_c), lambda i: (i, 0)),
        ),
        compiler_params=pltpu.CompilerParams(
            dimension_semantics=("parallel",),
            vmem_limit_bytes=int(vmem_limit),
        ),
    )(center.reshape(-1).astype(jnp.float32),
      radii.reshape(-1).astype(jnp.float32),
      pts_soa.astype(jnp.float32))


@functools.partial(jax.jit, static_argnames=("tm_target", "buffers"))
def torus_sdf_soa(points_soa, center, radii, *, tm_target=512, buffers=2):
    """Zero-copy fast path.

    points_soa: (3, rows, lane_c) with rows % 8 == 0 and lane_c % 128 == 0.
    Returns the padded (rows, lane_c) SDF slab (point i -> [i // lane_c,
    i % lane_c]); any pad tail holds finite garbage the consumer must ignore.
    """
    c, rows, lane_c = points_soa.shape
    assert c == 3 and rows % 8 == 0 and lane_c % 128 == 0, points_soa.shape
    tm = _pick_tm(rows, tm_target)
    return _torus_sdf_slab(points_soa, center, radii, tm=tm, buffers=buffers)


@functools.partial(jax.jit, static_argnames=("lane_c", "tm_target", "buffers"))
def torus_sdf(points, center, radii, *, lane_c=512, tm_target=512, buffers=2):
    """PyTorch-compatible path: points (..., 3) -> (N, 1) float32.

    AoS -> SoA conversion is one fused XLA copy; prefer torus_sdf_soa when the
    producer can keep points in SoA layout (removes that copy entirely).
    """
    assert lane_c % 128 == 0
    pts = points.reshape(-1, 3).astype(jnp.float32)
    n = pts.shape[0]

    rows = pl.cdiv(max(n, 1), lane_c)
    rows = pl.cdiv(rows, 8) * 8          # minimal pad: sublane packing only
    tm = _pick_tm(rows, tm_target)
    n_pad = rows * lane_c

    if n_pad != n:
        pts = jnp.pad(pts, ((0, n_pad - n), (0, 0)))
    # Single fused copy: pad + transpose fold together, reshape is a bitcast.
    pts_soa = pts.T.reshape(3, rows, lane_c)

    out = _torus_sdf_slab(pts_soa, center, radii, tm=tm, buffers=buffers)

    flat = out.reshape(-1)
    if n_pad != n:
        flat = flat[:n]                  # only when N is not slab-aligned
    return flat.reshape(n, 1)


def torus_sdf_ref(points, center, radii):
    """Pure-JAX reference mirroring the PyTorch forward."""
    pts = points.reshape(-1, 3).astype(jnp.float32)
    c = center.reshape(-1).astype(jnp.float32)
    r = radii.reshape(-1).astype(jnp.float32)
    diff = pts - c[None, :]
    qx = jnp.linalg.norm(diff[:, :2], axis=-1) - r[0]
    q = jnp.stack([qx, diff[:, 2]], axis=-1)
    return (jnp.linalg.norm(q, axis=-1) - r[1])[:, None]


if __name__ == "__main__":
    key = jax.random.PRNGKey(0)
    k_pts, k_soa = jax.random.split(key)

    # Deterministic "cfg" parameters, PyTorch param shapes (1, 3) / (1, 2).
    center = jnp.array([[0.1, -0.2, 0.05]], dtype=jnp.float32)
    radii = jnp.array([[0.6, 0.25]], dtype=jnp.float32)

    # 1) PyTorch-compatible AoS path: small point cloud, forward view(-1, 3).
    points = jax.random.normal(k_pts, (2, 16, 16, 3), dtype=jnp.float32)
    out = jax.block_until_ready(torus_sdf(points, center, radii))
    ref = torus_sdf_ref(points, center, radii)
    assert out.shape == (2 * 16 * 16, 1), out.shape
    assert jnp.allclose(out, ref, atol=1e-5, rtol=1e-5), \
        float(jnp.max(jnp.abs(out - ref)))

    # 2) Zero-copy SoA fast path on an already-aligned slab (3, 8, 128).
    n2, lane2 = 8 * 128, 128
    pts2 = jax.random.normal(k_soa, (n2, 3), dtype=jnp.float32)
    soa2 = pts2.T.reshape(3, n2 // lane2, lane2)
    out2 = jax.block_until_ready(torus_sdf_soa(soa2, center, radii))
    ref2 = torus_sdf_ref(pts2, center, radii)
    assert out2.shape == (n2 // lane2, lane2), out2.shape
    assert jnp.allclose(out2.reshape(-1, 1), ref2, atol=1e-5, rtol=1e-5), \
        float(jnp.max(jnp.abs(out2.reshape(-1, 1) - ref2)))

    print("KERNEL_OK")
</pallas_src>

<mosaic_0001>
module attributes {stable_mosaic.version = 11 : i64} {
  func.func @torus_sdf_kernel(%arg0: i32, %arg1: memref<3xf32, #tpu.memory_space<smem>>, %arg2: memref<2xf32, #tpu.memory_space<smem>>, %arg3: memref<3x8x512xf32, #tpu.memory_space<vmem>>, %arg4: memref<8x512xf32, #tpu.memory_space<vmem>>) attributes {dimension_semantics = [#tpu.dimension_semantics<parallel>], iteration_bounds = array<i64: 1>, scalar_prefetch = 0 : i64, scratch_operands = 0 : i64, tpu.core_type = #tpu.core_type<tc>, window_params = [{transform_indices = @transform_0, window_bounds = array<i64: 3>}, {transform_indices = @transform_1, window_bounds = array<i64: 2>}, {transform_indices = @transform_2, window_bounds = array<i64: 3, 8, 512>}, {transform_indices = @transform_3, window_bounds = array<i64: 8, 512>}]} {
    %c0 = arith.constant 0 : index
    %0 = memref.load %arg1[%c0] : memref<3xf32, #tpu.memory_space<smem>>
    %c1 = arith.constant 1 : index
    %1 = memref.load %arg1[%c1] : memref<3xf32, #tpu.memory_space<smem>>
    %c2 = arith.constant 2 : index
    %2 = memref.load %arg1[%c2] : memref<3xf32, #tpu.memory_space<smem>>
    %c0_0 = arith.constant 0 : index
    %3 = memref.load %arg2[%c0_0] : memref<2xf32, #tpu.memory_space<smem>>
    %c1_1 = arith.constant 1 : index
    %4 = memref.load %arg2[%c1_1] : memref<2xf32, #tpu.memory_space<smem>>
    %c0_2 = arith.constant 0 : index
    %c0_3 = arith.constant 0 : index
    %c0_4 = arith.constant 0 : index
    %5 = vector.load %arg3[%c0_2, %c0_3, %c0_4] : memref<3x8x512xf32, #tpu.memory_space<vmem>>, vector<1x8x512xf32>
    %6 = vector.shape_cast %5 : vector<1x8x512xf32> to vector<8x512xf32>
    %7 = vector.broadcast %0 : f32 to vector<8x512xf32>
    %8 = arith.subf %6, %7 : vector<8x512xf32>
    %c1_5 = arith.constant 1 : index
    %c0_6 = arith.constant 0 : index
    %c0_7 = arith.constant 0 : index
    %9 = vector.load %arg3[%c1_5, %c0_6, %c0_7] : memref<3x8x512xf32, #tpu.memory_space<vmem>>, vector<1x8x512xf32>
    %10 = vector.shape_cast %9 : vector<1x8x512xf32> to vector<8x512xf32>
    %11 = vector.broadcast %1 : f32 to vector<8x512xf32>
    %12 = arith.subf %10, %11 : vector<8x512xf32>
    %c2_8 = arith.constant 2 : index
    %c0_9 = arith.constant 0 : index
    %c0_10 = arith.constant 0 : index
    %13 = vector.load %arg3[%c2_8, %c0_9, %c0_10] : memref<3x8x512xf32, #tpu.memory_space<vmem>>, vector<1x8x512xf32>
    %14 = vector.shape_cast %13 : vector<1x8x512xf32> to vector<8x512xf32>
    %15 = vector.broadcast %2 : f32 to vector<8x512xf32>
    %16 = arith.subf %14, %15 : vector<8x512xf32>
    %17 = arith.mulf %8, %8 : vector<8x512xf32>
    %18 = arith.mulf %12, %12 : vector<8x512xf32>
    %19 = arith.addf %17, %18 : vector<8x512xf32>
    %20 = math.sqrt %19 : vector<8x512xf32>
    %21 = vector.broadcast %3 : f32 to vector<8x512xf32>
    %22 = arith.subf %20, %21 : vector<8x512xf32>
    %23 = arith.mulf %22, %22 : vector<8x512xf32>
    %24 = arith.mulf %16, %16 : vector<8x512xf32>
    %25 = arith.addf %23, %24 : vector<8x512xf32>
    %26 = math.sqrt %25 : vector<8x512xf32>
    %27 = vector.broadcast %4 : f32 to vector<8x512xf32>
    %28 = arith.subf %26, %27 : vector<8x512xf32>
    %c0_11 = arith.constant 0 : index
    %c0_12 = arith.constant 0 : index
    %29 = vector.load %arg4[%c0_11, %c0_12] : memref<8x512xf32, #tpu.memory_space<vmem>>, vector<8x512xf32>
    tpu.vector_store %arg4[%c0_11, %c0_12], %28 {strides = array<i32>} : memref<8x512xf32, #tpu.memory_space<vmem>>, vector<8x512xf32>,
    return
  }
  func.func @transform_0(%arg0: i32) -> i32 {
    %c0_i32 = arith.constant 0 : i32
    %c0_i32_0 = arith.constant 0 : i32
    return %c0_i32 : i32
  }
  func.func @transform_1(%arg0: i32) -> i32 {
    %c0_i32 = arith.constant 0 : i32
    %c0_i32_0 = arith.constant 0 : i32
    return %c0_i32 : i32
  }
  func.func @transform_2(%arg0: i32) -> (i32, i32, i32) {
    %c0_i32 = arith.constant 0 : i32
    %c0_i32_0 = arith.constant 0 : i32
    %c0_i32_1 = arith.constant 0 : i32
    return %c0_i32, %arg0, %c0_i32_0 : i32, i32, i32
  }
  func.func @transform_3(%arg0: i32) -> (i32, i32) {
    %c0_i32 = arith.constant 0 : i32
    %c0_i32_0 = arith.constant 0 : i32
    return %arg0, %c0_i32 : i32, i32
  }
}

</mosaic_0001>

<llo_original>
// kernel: torus_sdf.1
$region0: #{torus_sdf.1}
  #allocation0 [shape = 'u32[]', space=smem, size = 0x4, offset = 0x4, fixed_abs, tag = 'smem constant byte address 0x4 - core index']
  #allocation1 [shape = 'u32[72,128]{1,0:T(1,128)}', space=vmem, size = 0x9000, scoped, tag = 'internal scratch']
  %s0 = inlined_call_operand.vmem [shape: f32[3], index: 0, kind: input, shape index: {}]
  %s1 = inlined_call_operand.vmem [shape: f32[2], index: 1, kind: input, shape index: {}]
  %s2 = inlined_call_operand.vmem [shape: f32[3,8,512], index: 2, kind: input, shape index: {}]
  %s3 = inlined_call_operand.vmem [shape: f32[8,512], index: 3, kind: output, shape index: {}]
  %s4 = sld [smem:[#allocation0]]
  $region30: #{torus_sdf.1} parent=0
    _
  %s6 = ssub.s32 1, %s4
  %s7 = scalar_select 0, %s6, %s4
  $region1: #{torus_sdf.1} parent=0
    #allocation2 [shape = 'u8[512]{0}', space=smem, size = 0x200, scoped, tag = 'input window, operand 0, single buffered']
    #allocation3 [shape = 's32[1]{0}', space=sflag, size = 0x4, scoped, tag = 'scoped memory for torus_sdf.1']
    #allocation4 [shape = 'u8[512]{0}', space=smem, size = 0x200, scoped, tag = 'input window, operand 1, single buffered']
    #allocation5 [shape = 's32[1]{0}', space=sflag, size = 0x4, scoped, tag = 'scoped memory for torus_sdf.1']
    %8 = vsyncpa [#allocation3], 0
    %9 = vsyncpa [#allocation5], 0
    // Predicated region
    $region2: #{torus_sdf.1} parent=1 // pred_check
      _
    $region3: #{torus_sdf.1} parent=1 // pred_check_branch
      %11 = sbr.rel (0) target = $region5
    $region4: #{torus_sdf.1} parent=1 // pred_region
      %13 = vsyncadd [#allocation3], 0
      %s15 = sshll.u32 %s0, 4
      %s16 = int_to_ptr.vmem [resolvable:$true] %s15
      %18 = dma.vmem_to_smem %s16, 16, [#allocation2], [#allocation3]
    $region5: #{torus_sdf.1} parent=1 // pred_fallthru
      _
    // Predicated region
    $region6: #{torus_sdf.1} parent=1 // pred_check
      _
    $region7: #{torus_sdf.1} parent=1 // pred_check_branch
      %20 = sbr.rel (0) target = $region9
    $region8: #{torus_sdf.1} parent=1 // pred_region
      %22 = vsyncadd [#allocation5], 0
      %s24 = sshll.u32 %s1, 4
      %s25 = int_to_ptr.vmem [resolvable:$true] %s24
      %27 = dma.vmem_to_smem %s25, 16, [#allocation4], [#allocation5]
    $region9: #{torus_sdf.1} parent=1 // pred_fallthru
      _
    // Predicated region
    $region10: #{torus_sdf.1} parent=1 // pred_check
      _
    $region11: #{torus_sdf.1} parent=1 // pred_check_branch
      %29 = sbr.rel (0) target = $region13
    $region12: #{torus_sdf.1} parent=1 // pred_region
      _
    $region13: #{torus_sdf.1} parent=1 // pred_fallthru
      _
    // Predicated region
    $region14: #{torus_sdf.1} parent=1 // pred_check
      _
    $region15: #{torus_sdf.1} parent=1 // pred_check_branch
      %31 = sbr.rel (0) target = $region17
    $region16: #{torus_sdf.1} parent=1 // pred_region
      %33 = dma.done [#allocation3], 16
    $region17: #{torus_sdf.1} parent=1 // pred_fallthru
      _
    // Predicated region
    $region18: #{torus_sdf.1} parent=1 // pred_check
      _
    $region19: #{torus_sdf.1} parent=1 // pred_check_branch
      %35 = sbr.rel (0) target = $region21
    $region20: #{torus_sdf.1} parent=1 // pred_region
      %37 = dma.done [#allocation5], 16
    $region21: #{torus_sdf.1} parent=1 // pred_fallthru
      _
    %38 = sfence
    %s39 = sld [smem:[#allocation2]]
    %s40 = sld [smem:[#allocation2 + $0x1]]
    %s41 = sld [smem:[#allocation2 + $0x2]]
    %s42 = sld [smem:[#allocation4]]
    %s43 = sld [smem:[#allocation4 + $0x1]]
    %v44 = vld [vmem:[%s2] sm:$0xff]
    %v45 = vld [vmem:[%s2 + $0x8] sm:$0xff]
    %v46 = vld [vmem:[%s2 + $0x10] sm:$0xff]
    %v47 = vld [vmem:[%s2 + $0x18] sm:$0xff]
    %v48 = vstv %s39
    %v49 = vsub.f32 %v44, %v48
    %v50 = vsub.f32 %v45, %v48
    %v51 = vsub.f32 %v46, %v48
    %v52 = vsub.f32 %v47, %v48
    %s53 = scalar_lea.vmem %s2, 32
    %v54 = vld [vmem:[%s53] sm:$0xff]
    %v55 = vld [vmem:[%s53 + $0x8] sm:$0xff]
    %v56 = vld [vmem:[%s53 + $0x10] sm:$0xff]
    %v57 = vld [vmem:[%s53 + $0x18] sm:$0xff]
    %v58 = vstv %s40
    %v59 = vsub.f32 %v54, %v58
    %v60 = vsub.f32 %v55, %v58
    %v61 = vsub.f32 %v56, %v58
    %v62 = vsub.f32 %v57, %v58
    %s63 = scalar_lea.vmem %s2, 64
    %v64 = vld [vmem:[%s63] sm:$0xff]
    %v65 = vld [vmem:[%s63 + $0x8] sm:$0xff]
    %v66 = vld [vmem:[%s63 + $0x10] sm:$0xff]
    %v67 = vld [vmem:[%s63 + $0x18] sm:$0xff]
    %v68 = vstv %s41
    %v69 = vsub.f32 %v64, %v68
    %v70 = vsub.f32 %v65, %v68
    %v71 = vsub.f32 %v66, %v68
    %v72 = vsub.f32 %v67, %v68
    %v73 = vmul.f32 %v49, %v49
    %v74 = vmul.f32 %v50, %v50
    %v75 = vmul.f32 %v51, %v51
    %v76 = vmul.f32 %v52, %v52
    %v77 = vmul.f32 %v59, %v59
    %v78 = vmul.f32 %v60, %v60
    %v79 = vmul.f32 %v61, %v61
    %v80 = vmul.f32 %v62, %v62
    %v81 = vadd.f32 %v73, %v77
    %v82 = vadd.f32 %v74, %v78
    %v83 = vadd.f32 %v75, %v79
    %v84 = vadd.f32 %v76, %v80
    %v85 = vrsqrt.pop %v81
    %v86 = vmul.f32 %v85, %v81
    %v87 = vmul.f32 %v86, %v85
    %v88 = vmul.f32 0.5, %v87
    %v89 = vsub.f32 1.5, %v88
    %v90 = vmul.f32 %v85, %v89
    %v91 = vmul.f32 %v81, %v90
    %vm92 = vcmp.eq.f32.partialorder %v81, inf
    %v93 = vsel %vm92, %v81, %v91
    %vm94 = vcmp.eq.f32.partialorder %v81, 0.0
    %v95 = vand.u32 %v81, 2147483648
    %v96 = vsel %vm94, %v95, %v93
    %v97 = vrsqrt.pop %v82
    %v98 = vmul.f32 %v97, %v82
    %v99 = vmul.f32 %v98, %v97
    %v100 = vmul.f32 0.5, %v99
    %v101 = vsub.f32 1.5, %v100
    %v102 = vmul.f32 %v97, %v101
    %v103 = vmul.f32 %v82, %v102
    %vm104 = vcmp.eq.f32.partialorder %v82, inf
    %v105 = vsel %vm104, %v82, %v103
    %vm106 = vcmp.eq.f32.partialorder %v82, 0.0
    %v107 = vand.u32 %v82, 2147483648
    %v108 = vsel %vm106, %v107, %v105
    %v109 = vrsqrt.pop %v83
    %v110 = vmul.f32 %v109, %v83
    %v111 = vmul.f32 %v110, %v109
    %v112 = vmul.f32 0.5, %v111
    %v113 = vsub.f32 1.5, %v112
    %v114 = vmul.f32 %v109, %v113
    %v115 = vmul.f32 %v83, %v114
    %vm116 = vcmp.eq.f32.partialorder %v83, inf
    %v117 = vsel %vm116, %v83, %v115
    %vm118 = vcmp.eq.f32.partialorder %v83, 0.0
    %v119 = vand.u32 %v83, 2147483648
    %v120 = vsel %vm118, %v119, %v117
    %v121 = vrsqrt.pop %v84
    %v122 = vmul.f32 %v121, %v84
    %v123 = vmul.f32 %v122, %v121
    %v124 = vmul.f32 0.5, %v123
    %v125 = vsub.f32 1.5, %v124
    %v126 = vmul.f32 %v121, %v125
    %v127 = vmul.f32 %v84, %v126
    %vm128 = vcmp.eq.f32.partialorder %v84, inf
    %v129 = vsel %vm128, %v84, %v127
    %vm130 = vcmp.eq.f32.partialorder %v84, 0.0
    %v131 = vand.u32 %v84, 2147483648
    %v132 = vsel %vm130, %v131, %v129
    %v133 = vstv %s42
    %v134 = vsub.f32 %v96, %v133
    %v135 = vsub.f32 %v108, %v133
    %v136 = vsub.f32 %v120, %v133
    %v137 = vsub.f32 %v132, %v133
    %v138 = vmul.f32 %v134, %v134
    %v139 = vmul.f32 %v135, %v135
    %v140 = vmul.f32 %v136, %v136
    %v141 = vmul.f32 %v137, %v137
    %v142 = vmul.f32 %v69, %v69
    %v143 = vmul.f32 %v70, %v70
    %v144 = vmul.f32 %v71, %v71
    %v145 = vmul.f32 %v72, %v72
    %v146 = vadd.f32 %v138, %v142
    %v147 = vadd.f32 %v139, %v143
    %v148 = vadd.f32 %v140, %v144
    %v149 = vadd.f32 %v141, %v145
    %v150 = vrsqrt.pop %v146
    %v151 = vmul.f32 %v150, %v146
    %v152 = vmul.f32 %v151, %v150
    %v153 = vmul.f32 0.5, %v152
    %v154 = vsub.f32 1.5, %v153
    %v155 = vmul.f32 %v150, %v154
    %v156 = vmul.f32 %v146, %v155
    %vm157 = vcmp.eq.f32.partialorder %v146, inf
    %v158 = vsel %vm157, %v146, %v156
    %vm159 = vcmp.eq.f32.partialorder %v146, 0.0
    %v160 = vand.u32 %v146, 2147483648
    %v161 = vsel %vm159, %v160, %v158
    %v162 = vrsqrt.pop %v147
    %v163 = vmul.f32 %v162, %v147
    %v164 = vmul.f32 %v163, %v162
    %v165 = vmul.f32 0.5, %v164
    %v166 = vsub.f32 1.5, %v165
    %v167 = vmul.f32 %v162, %v166
    %v168 = vmul.f32 %v147, %v167
    %vm169 = vcmp.eq.f32.partialorder %v147, inf
    %v170 = vsel %vm169, %v147, %v168
    %vm171 = vcmp.eq.f32.partialorder %v147, 0.0
    %v172 = vand.u32 %v147, 2147483648
    %v173 = vsel %vm171, %v172, %v170
    %v174 = vrsqrt.pop %v148
    %v175 = vmul.f32 %v174, %v148
    %v176 = vmul.f32 %v175, %v174
    %v177 = vmul.f32 0.5, %v176
    %v178 = vsub.f32 1.5, %v177
    %v179 = vmul.f32 %v174, %v178
    %v180 = vmul.f32 %v148, %v179
    %vm181 = vcmp.eq.f32.partialorder %v148, inf
    %v182 = vsel %vm181, %v148, %v180
    %vm183 = vcmp.eq.f32.partialorder %v148, 0.0
    %v184 = vand.u32 %v148, 2147483648
    %v185 = vsel %vm183, %v184, %v182
    %v186 = vrsqrt.pop %v149
    %v187 = vmul.f32 %v186, %v149
    %v188 = vmul.f32 %v187, %v186
    %v189 = vmul.f32 0.5, %v188
    %v190 = vsub.f32 1.5, %v189
    %v191 = vmul.f32 %v186, %v190
    %v192 = vmul.f32 %v149, %v191
    %vm193 = vcmp.eq.f32.partialorder %v149, inf
    %v194 = vsel %vm193, %v149, %v192
    %vm195 = vcmp.eq.f32.partialorder %v149, 0.0
    %v196 = vand.u32 %v149, 2147483648
    %v197 = vsel %vm195, %v196, %v194
    %v198 = vstv %s43
    %v199 = vsub.f32 %v161, %v198
    %v200 = vsub.f32 %v173, %v198
    %v201 = vsub.f32 %v185, %v198
    %v202 = vsub.f32 %v197, %v198
    %203 = vst [vmem:[%s3] sm:$0xff] %v199
    %204 = vst [vmem:[%s3 + $0x8] sm:$0xff] %v200
    %205 = vst [vmem:[%s3 + $0x10] sm:$0xff] %v201
    %206 = vst [vmem:[%s3 + $0x18] sm:$0xff] %v202
    // Predicated region
    $region22: #{torus_sdf.1} parent=1 // pred_check
      _
    $region23: #{torus_sdf.1} parent=1 // pred_check_branch
      %208 = sbr.rel (0) target = $region25
    $region24: #{torus_sdf.1} parent=1 // pred_region
      _
    $region25: #{torus_sdf.1} parent=1 // pred_fallthru
      _
    // Predicated region
    $region26: #{torus_sdf.1} parent=1 // pred_check
      _
    $region27: #{torus_sdf.1} parent=1 // pred_check_branch
      %210 = sbr.rel (0) target = $region29
    $region28: #{torus_sdf.1} parent=1 // pred_region
      _
    $region29: #{torus_sdf.1} parent=1 // pred_fallthru
      _
    %211 = vsyncpa [#allocation3], 1
    %212 = vsyncpa [#allocation5], 1

</llo_original>
